<compile_context>
chip_gen: v7x
topology: tpu7x:2x2x1
jax: 0.10.0
libtpu: 0.0.40
codegen_flags: <defaults>
</compile_context>

<pallas_src>
import math

import jax
import jax.numpy as jnp
from jax.experimental import pallas as pl
from jax.experimental.pallas import tpu as pltpu


def _copy_kernel(w_ref, o_ref):
    # Materialize the parameter: per-tile identity copy through VMEM.
    o_ref[...] = w_ref[...]


def _sublane_multiple(dtype) -> int:
    # Rows per packed sublane group: f32 -> 8, bf16/f16 -> 16, int8/fp8 -> 32.
    itemsize = jnp.dtype(dtype).itemsize
    return max(8, 32 // max(itemsize, 1))


def my_3d_parameter_forward(weights: jax.Array,
                            *,
                            materialize: bool = False,
                            tile_m: int = 512) -> jax.Array:
    """Pallas equivalent of My_3D_Parameter.forward().

    forward() just returns the parameter, so the default (and fastest) path is
    the identity — no kernel, no HBM round-trip.  Set `materialize=True` to
    force a fresh HBM copy via a tiled, pipelined Pallas kernel.
    """
    if not materialize:
        # Identity: returning a parameter needs no kernel at all.
        return weights

    size_in, size_out = weights.shape
    sub = _sublane_multiple(weights.dtype)
    itemsize = jnp.dtype(weights.dtype).itemsize

    if size_out % 128 == 0 and size_in % sub == 0 and size_in > sub:
        # Lane-dense, (sub, 128)-aligned row tiling.
        bytes_per_row = size_out * itemsize
        # Cap one tile at ~2 MiB so double-buffered in+out (4x tile) stays
        # well under v5e's 16 MiB scoped-VMEM default (and v6e/v7x's 32 MiB).
        budget = 2 * 1024 * 1024
        cap = max(sub, (budget // max(bytes_per_row, 1)) // sub * sub)
        tm = min(size_in, max(sub, (tile_m // sub) * sub), cap)
        # Shrink until it divides size_in evenly (terminates at `sub`).
        while size_in % tm != 0:
            tm -= sub

        grid = (size_in // tm,)
        in_specs = [pl.BlockSpec((tm, size_out), lambda i: (i, 0))]
        out_specs = pl.BlockSpec((tm, size_out), lambda i: (i, 0))
        # "parallel": independent row tiles -> v7x can split across its 2 TCs.
        semantics = ("parallel",)
    else:
        # Ragged / tiny shapes: a single full-array block is always legal.
        grid = (1,)
        in_specs = [pl.BlockSpec((size_in, size_out), lambda i: (0, 0))]
        out_specs = pl.BlockSpec((size_in, size_out), lambda i: (0, 0))
        semantics = ("arbitrary",)

    return pl.pallas_call(
        _copy_kernel,
        out_shape=jax.ShapeDtypeStruct((size_in, size_out), weights.dtype),
        grid=grid,
        in_specs=in_specs,
        out_specs=out_specs,
        compiler_params=pltpu.CompilerParams(dimension_semantics=semantics),
    )(weights)


def init_weights(key, size_in: int, size_out: int, dtype=jnp.float32) -> jax.Array:
    """kaiming_uniform_(a=sqrt(5)) matching nn.init semantics for a 2-D tensor.

    fan_in = tensor.size(1) = size_out;
    bound = sqrt(3) * sqrt(2 / (1 + a^2)) / sqrt(fan_in) = 1 / sqrt(fan_in).
    """
    fan_in = size_out
    gain = math.sqrt(2.0 / (1.0 + 5.0))  # a = sqrt(5)
    bound = math.sqrt(3.0) * gain / math.sqrt(fan_in)
    return jax.random.uniform(
        key, (size_in, size_out), dtype=dtype, minval=-bound, maxval=bound
    )


if __name__ == "__main__":
    # Small, lane-aligned demo shapes (last dim = 128, rows multiple of 8).
    size_in, size_out = 256, 128

    key = jax.random.PRNGKey(0)
    weights = init_weights(key, size_in, size_out)

    # Default forward path: pure identity (the recommended fast path).
    ident = my_3d_parameter_forward(weights)
    assert ident.shape == (size_in, size_out)
    assert bool(jnp.array_equal(ident, weights))

    # Materialized-copy path: exercises the tiled, pipelined Pallas kernel
    # (tile_m=64 -> grid=(4,), multi-step pipelined copy).
    out = my_3d_parameter_forward(weights, materialize=True, tile_m=64)
    out = jax.block_until_ready(out)

    # Forward semantics check: output must equal the parameter exactly.
    assert out.shape == (size_in, size_out)
    assert out.dtype == weights.dtype
    assert bool(jnp.array_equal(out, weights))

    print("KERNEL_OK")
</pallas_src>

<mosaic_0001>
module attributes {stable_mosaic.version = 11 : i64} {
  func.func @_copy_kernel(%arg0: i32, %arg1: memref<64x128xf32, #tpu.memory_space<vmem>>, %arg2: memref<64x128xf32, #tpu.memory_space<vmem>>) attributes {dimension_semantics = [#tpu.dimension_semantics<parallel>], iteration_bounds = array<i64: 4>, scalar_prefetch = 0 : i64, scratch_operands = 0 : i64, tpu.core_type = #tpu.core_type<tc>, window_params = [{transform_indices = @transform_0, window_bounds = array<i64: 64, 128>}, {transform_indices = @transform_1, window_bounds = array<i64: 64, 128>}]} {
    %c0 = arith.constant 0 : index
    %c0_0 = arith.constant 0 : index
    %0 = vector.load %arg1[%c0, %c0_0] : memref<64x128xf32, #tpu.memory_space<vmem>>, vector<64x128xf32>
    %c0_1 = arith.constant 0 : index
    %c0_2 = arith.constant 0 : index
    %1 = vector.load %arg2[%c0_1, %c0_2] : memref<64x128xf32, #tpu.memory_space<vmem>>, vector<64x128xf32>
    tpu.vector_store %arg2[%c0_1, %c0_2], %0 {strides = array<i32>} : memref<64x128xf32, #tpu.memory_space<vmem>>, vector<64x128xf32>,
    return
  }
  func.func @transform_0(%arg0: i32) -> (i32, i32) {
    %c0_i32 = arith.constant 0 : i32
    %c0_i32_0 = arith.constant 0 : i32
    return %arg0, %c0_i32 : i32, i32
  }
  func.func @transform_1(%arg0: i32) -> (i32, i32) {
    %c0_i32 = arith.constant 0 : i32
    %c0_i32_0 = arith.constant 0 : i32
    return %arg0, %c0_i32 : i32, i32
  }
}

</mosaic_0001>

<llo_original>
// kernel: tpu_custom_call.1
$region0: #{tpu_custom_call.1}
  #allocation0 [shape = 'u32[]', space=smem, size = 0x4, offset = 0x4, fixed_abs, tag = 'smem constant byte address 0x4 - core index']
  #allocation1 [shape = 'u32[144,128]{1,0:T(1,128)}', space=vmem, size = 0x12000, scoped, tag = 'internal scratch']
  %s0 = inlined_call_operand.hbm [shape: f32[256,128], index: 0, kind: input, shape index: {}]
  %s1 = inlined_call_operand.hbm [shape: f32[256,128], index: 1, kind: output, shape index: {}]
  %s2 = sld [smem:[#allocation0]]
  $region41: #{tpu_custom_call.1} parent=0
    _
  %s4 = ssub.s32 1, %s2
  %s5 = scalar_select 0, %s4, %s2
  $region1: #{tpu_custom_call.1} parent=0
    #allocation2 [shape = 'u8[65536]{0}', space=vmem, size = 0x10000, scoped, tag = 'input window, operand 0']
    #allocation3 [shape = 's32[2]{0}', space=sflag, size = 0x8, scoped, tag = 'scoped memory for tpu_custom_call.1']
    #allocation4 [shape = 's32[2]{0}', space=sflag, size = 0x8, scoped, tag = 'scoped memory for tpu_custom_call.1']
    #allocation5 [shape = 'u8[65536]{0}', space=vmem, size = 0x10000, scoped, tag = 'output window, operand 0']
    %6 = vsyncpa [#allocation3], 0
    %s7 = scalar_lea.sflag [#allocation3], 1
    %8 = vsyncpa %s7, 0
    %9 = vsyncpa [#allocation4], 0
    %s10 = scalar_lea.sflag [#allocation4], 1
    %11 = vsyncpa %s10, 0
    loop: start=0, step=1, limit=6
    $region2: #{tpu_custom_call.1} parent=1 // loop_pre_header
      _
    $region3: #{tpu_custom_call.1} parent=1 // loop_header
      %s13 = sphi 0, %s17
      %p14 = scmp.ge.s32.totalorder %s13, 6
      %s23 = sphi 0, %s25
      %s26 = sphi 0, %s23
      %s27 = sphi 0, %s26
      %s43 = sphi 0, %s27
      %s49 = sphi 0, %s51
      %s52 = sphi 0, %s49
      %s53 = sphi 0, %s52
      %s69 = sphi 0, %s53
    $region4: #{tpu_custom_call.1} parent=1 // loop_header_branch
      %16 = sbr.rel (%p14) target = $region8
    $region5: #{tpu_custom_call.1} parent=1 // loop_body
      %s18 = ssub.s32 %s13, 1
      %s19 = ssub.s32 %s13, 2
      %s20 = sadd.s32 %s13, 1
      %s21 = ssub.s32 %s13, %s20
      %p22 = scmp.eq.s32.totalorder %s21, 0
      %s24 = sadd.s32 %s23, 1
      %s25 = scalar_select %p22, %s23, %s24
      %p28 = pneg %p22
      %p29 = scmp.eq.s32.totalorder %s13, 3
      %p30 = por %p28, %p29
      %p31 = scmp.ne.s32.totalorder %s23, %s26
      %p32 = scmp.eq.s32.totalorder %s13, 0
      %p33 = por %p31, %p32
      %p34 = scmp.ne.s32.totalorder %s23, %s26
      %p35 = scmp.eq.s32.totalorder %s18, 3
      %p36 = por %p34, %p35
      %p37 = scmp.ne.s32.totalorder %s26, %s27
      %p38 = scmp.eq.s32.totalorder %s18, 0
      %p39 = por %p37, %p38
      %p40 = scmp.ne.s32.totalorder %s26, %s27
      %p41 = scmp.eq.s32.totalorder %s19, 3
      %p42 = por %p40, %p41
      %p44 = scmp.ne.s32.totalorder %s27, %s43
      %p45 = scmp.eq.s32.totalorder %s19, 0
      %p46 = por %p44, %p45
      %s47 = ssub.s32 %s13, %s20
      %p48 = scmp.eq.s32.totalorder %s47, 0
      %s50 = sadd.s32 %s49, 1
      %s51 = scalar_select %p48, %s49, %s50
      %p54 = pneg %p48
      %p55 = scmp.eq.s32.totalorder %s13, 3
      %p56 = por %p54, %p55
      %p57 = scmp.ne.s32.totalorder %s49, %s52
      %p58 = scmp.eq.s32.totalorder %s13, 0
      %p59 = por %p57, %p58
      %p60 = scmp.ne.s32.totalorder %s49, %s52
      %p61 = scmp.eq.s32.totalorder %s18, 3
      %p62 = por %p60, %p61
      %p63 = scmp.ne.s32.totalorder %s52, %s53
      %p64 = scmp.eq.s32.totalorder %s18, 0
      %p65 = por %p63, %p64
      %p66 = scmp.ne.s32.totalorder %s52, %s53
      %p67 = scmp.eq.s32.totalorder %s19, 3
      %p68 = por %p66, %p67
      %p70 = scmp.ne.s32.totalorder %s53, %s69
      %p71 = scmp.eq.s32.totalorder %s19, 0
      %p72 = por %p70, %p71
      %p73 = scmp.le.s32.totalorder 1, %s13
      %p74 = scmp.lt.s32.totalorder %s13, 5
      %p75 = pnand %p73, %p74
      %p76 = pneg %p75
      // Predicated region
      $region9: #{tpu_custom_call.1} parent=5 // pred_check
        _
      $region10: #{tpu_custom_call.1} parent=5 // pred_check_branch
        %78 = sbr.rel (%p75) target = $region12
      $region11: #{tpu_custom_call.1} parent=5 // pred_region
        %s79 = ssub.s32 %s13, 1
      $region12: #{tpu_custom_call.1} parent=5 // pred_fallthru
        _
      %p80 = scmp.lt.s32.totalorder %s13, 4
      // Predicated region
      $region13: #{tpu_custom_call.1} parent=5 // pred_check
        %p81 = pneg %p80
      $region14: #{tpu_custom_call.1} parent=5 // pred_check_branch
        %83 = sbr.rel (%p81) target = $region16
      $region15: #{tpu_custom_call.1} parent=5 // pred_region
        // Predicated region
        $region17: #{tpu_custom_call.1} parent=15 // pred_check
          %p84 = pneg %p33
        $region18: #{tpu_custom_call.1} parent=15 // pred_check_branch
          %86 = sbr.rel (%p84) target = $region20
        $region19: #{tpu_custom_call.1} parent=15 // pred_region
          %s87 = sand.u32 %s23, 1
          %s88 = scalar_lea.sflag [#allocation3], %s87
          %s89 = sand.u32 %s23, 1
          %s90 = smul.addr %s89, 64
          %s91 = scalar_lea.vmem [#allocation2], %s90
          %s92 = smul.u32 8, %s13
          %s94 = ssub.s32 1024, 1024
          %95 = vsyncadd %s88, %s94
          %s96 = smul.addr %s92, 128
          %s97 = scalar_lea.hbm %s0, %s96
          %s98 = sshll.u32 %s91, 4
          %s99 = int_to_ptr.vmem [resolvable:$true] %s98
          %104 = dma.hbm_to_vmem [thread:$0]  %s97, 1024, %s99, %s88, 128, 128, 8
        $region20: #{tpu_custom_call.1} parent=15 // pred_fallthru
          _
      $region16: #{tpu_custom_call.1} parent=5 // pred_fallthru
        _
      %p105 = scmp.le.s32.totalorder 1, %s13
      %p106 = scmp.lt.s32.totalorder %s13, 5
      %p107 = pnand %p105, %p106
      %p108 = pneg %p107
      // Predicated region
      $region21: #{tpu_custom_call.1} parent=5 // pred_check
        _
      $region22: #{tpu_custom_call.1} parent=5 // pred_check_branch
        %110 = sbr.rel (%p107) target = $region24
      $region23: #{tpu_custom_call.1} parent=5 // pred_region
        %s111 = ssub.s32 %s13, 1
        %s112 = sand.u32 %s26, 1
        %s113 = scalar_lea.sflag [#allocation3], %s112
        %s114 = sand.u32 %s26, 1
        %s115 = smul.addr %s114, 64
        %s116 = scalar_lea.vmem [#allocation2], %s115
        // Predicated region
        $region25: #{tpu_custom_call.1} parent=23 // pred_check
          %p117 = pneg %p39
        $region26: #{tpu_custom_call.1} parent=23 // pred_check_branch
          %119 = sbr.rel (%p117) target = $region28
        $region27: #{tpu_custom_call.1} parent=23 // pred_region
          %120 = dma.done %s113, 1024
        $region28: #{tpu_custom_call.1} parent=23 // pred_fallthru
          _
        %s121 = sand.u32 %s26, 1
        %s122 = scalar_lea.sflag [#allocation3], %s121
        %s123 = sand.u32 %s26, 1
        %s124 = smul.addr %s123, 64
        %s125 = scalar_lea.vmem [#allocation2], %s124
        %p126 = pneg %p39
        %p127 = pneg %p36
        %p128 = pneg %p65
        %p129 = pneg %p62
        %s130 = sand.u32 %s52, 1
        %s131 = scalar_lea.sflag [#allocation4], %s130
        %s132 = sand.u32 %s52, 1
        %s133 = smul.addr %s132, 64
        %s134 = scalar_lea.vmem [#allocation5], %s133
        %s135 = smul.u32 8, %s18
        %s136 = smul.u32 8, %s18
        %v137 = vld [vmem:[%s116] sm:$0xff]
        %v138 = vld [vmem:[%s116 + $0x8] sm:$0xff]
        %v139 = vld [vmem:[%s116 + $0x10] sm:$0xff]
        %v140 = vld [vmem:[%s116 + $0x18] sm:$0xff]
        %v141 = vld [vmem:[%s116 + $0x20] sm:$0xff]
        %v142 = vld [vmem:[%s116 + $0x28] sm:$0xff]
        %v143 = vld [vmem:[%s116 + $0x30] sm:$0xff]
        %v144 = vld [vmem:[%s116 + $0x38] sm:$0xff]
        %145 = vst [vmem:[%s134] sm:$0xff] %v137
        %146 = vst [vmem:[%s134 + $0x8] sm:$0xff] %v138
        %147 = vst [vmem:[%s134 + $0x10] sm:$0xff] %v139
        %148 = vst [vmem:[%s134 + $0x18] sm:$0xff] %v140
        %149 = vst [vmem:[%s134 + $0x20] sm:$0xff] %v141
        %150 = vst [vmem:[%s134 + $0x28] sm:$0xff] %v142
        %151 = vst [vmem:[%s134 + $0x30] sm:$0xff] %v143
        %152 = vst [vmem:[%s134 + $0x38] sm:$0xff] %v144
        %s153 = sand.u32 %s52, 1
        %s154 = scalar_lea.sflag [#allocation4], %s153
        %s155 = sand.u32 %s52, 1
        %s156 = smul.addr %s155, 64
        %s157 = scalar_lea.vmem [#allocation5], %s156
        // Predicated region
        $region29: #{tpu_custom_call.1} parent=23 // pred_check
          %p158 = pneg %p62
        $region30: #{tpu_custom_call.1} parent=23 // pred_check_branch
          %160 = sbr.rel (%p158) target = $region32
        $region31: #{tpu_custom_call.1} parent=23 // pred_region
          %s161 = smul.u32 8, %s18
          %s163 = ssub.s32 1024, 1024
          %164 = vsyncadd %s154, %s163
          %s165 = smul.addr %s161, 128
          %s166 = scalar_lea.hbm %s1, %s165
          %s167 = sshll.u32 %s157, 4
          %s168 = int_to_ptr.vmem [resolvable:$true] %s167
          %173 = dma.vmem_to_hbm [thread:$0]  %s168, 1024, %s166, %s154, 128, 128, 8
        $region32: #{tpu_custom_call.1} parent=23 // pred_fallthru
          _
      $region24: #{tpu_custom_call.1} parent=5 // pred_fallthru
        _
      %p174 = scmp.le.s32.totalorder 2, %s13
      // Predicated region
      $region33: #{tpu_custom_call.1} parent=5 // pred_check
        %p175 = pneg %p174
      $region34: #{tpu_custom_call.1} parent=5 // pred_check_branch
        %177 = sbr.rel (%p175) target = $region36
      $region35: #{tpu_custom_call.1} parent=5 // pred_region
        %s178 = ssub.s32 %s13, 2
        // Predicated region
        $region37: #{tpu_custom_call.1} parent=35 // pred_check
          %p179 = pneg %p68
        $region38: #{tpu_custom_call.1} parent=35 // pred_check_branch
          %181 = sbr.rel (%p179) target = $region40
        $region39: #{tpu_custom_call.1} parent=35 // pred_region
          %s182 = sand.u32 %s53, 1
          %s183 = scalar_lea.sflag [#allocation4], %s182
          %s184 = sand.u32 %s53, 1
          %s185 = smul.addr %s184, 64
          %s186 = scalar_lea.vmem [#allocation5], %s185
          %187 = dma.done %s183, 1024
        $region40: #{tpu_custom_call.1} parent=35 // pred_fallthru
          _
      $region36: #{tpu_custom_call.1} parent=5 // pred_fallthru
        _
    $region6: #{tpu_custom_call.1} parent=1 // loop_footer
      %s17 = sadd.s32 1, %s13
    $region7: #{tpu_custom_call.1} parent=1 // loop_footer_branch
      %12 = sbr.rel target = $region3
    $region8: #{tpu_custom_call.1} parent=1 // loop_exit
      _
    %188 = vsyncpa [#allocation3], 1
    %s189 = scalar_lea.sflag [#allocation3], 1
    %190 = vsyncpa %s189, 1
    %191 = vsyncpa [#allocation4], 1
    %s192 = scalar_lea.sflag [#allocation4], 1
    %193 = vsyncpa %s192, 1

</llo_original>
